<compile_context>
chip_gen: v6e
topology: v6e:2x2x1
jax: 0.10.0
libtpu: 0.0.40
codegen_flags: <defaults>
</compile_context>

<pallas_src>
import functools

import jax
import jax.numpy as jnp
from jax.experimental import pallas as pl
from jax.experimental.pallas import tpu as pltpu


# -----------------------------------------------------------------------------
# Kernel
# -----------------------------------------------------------------------------
def _conv_bn_act_kernel(x_ref, b_ref, bias_ref, out_ref, xpad_ref, *,
                        act, compute_dtype):
    """Fused 3x3 'same' conv + folded BatchNorm + activation, one batch element.

    x_ref    : (1, H, W*Cin)        input slab (channels fastest along lanes)
    b_ref    : (3, W*Cin, W*Cout)   banded weight matrices (BN scale folded in)
    bias_ref : (1, W*Cout)          folded conv/BN bias, tiled across W
    out_ref  : (1, H, W*Cout)       lane-dense output slab
    xpad_ref : (H+2, W*Cin) f32     VMEM scratch: vertically zero-padded input
    """
    H = out_ref.shape[1]
    WCin = x_ref.shape[2]
    WCout = out_ref.shape[2]
    KH = b_ref.shape[0]

    # Vertical zero padding lives in VMEM.  The border rows are rewritten every
    # grid step so the scratch is valid on every core (grid axis is "parallel"
    # and scratch contents are per-core / not guaranteed initialized).
    zero_row = jnp.zeros((1, WCin), xpad_ref.dtype)
    xpad_ref[0:1, :] = zero_row
    xpad_ref[H + 1:H + 2, :] = zero_row
    xpad_ref[1:H + 1, :] = x_ref[0]

    # Three chained MXU matmuls (one per kernel row), f32 accumulation.
    # Horizontal padding is already folded into the band structure of b_ref.
    acc = jnp.zeros((H, WCout), jnp.float32)
    for dy in range(KH):
        lhs = xpad_ref[dy:dy + H, :].astype(compute_dtype)
        acc = acc + jnp.dot(lhs, b_ref[dy], preferred_element_type=jnp.float32)

    y = acc + bias_ref[...]                 # folded BatchNorm (scale is in weights)
    if act == "relu":
        y = jnp.maximum(y, 0.0)
    elif act == "lrelu":
        y = jnp.where(y > 0.0, y, 0.01 * y)
    elif act == "sigmoid":
        y = jax.nn.sigmoid(y)
    elif act is not None:                   # None -> dummy_act (identity)
        raise ValueError(f"unsupported activation: {act}")
    out_ref[0] = y.astype(out_ref.dtype)


# -----------------------------------------------------------------------------
# Wrapper-side weight transformation: 3x3 taps -> banded matrices
# -----------------------------------------------------------------------------
def _banded_weights(w_hwio, W, compute_dtype):
    """Fold the 3 horizontal taps (and horizontal zero-padding) into banded
    matrices, one per kernel row:

        B[dy][x_in*Cin + ci, x_out*Cout + co] = w[dy, dx, ci, co]
            with dx = x_in - x_out + 1 in {0, 1, 2}, else 0.

    Out-of-range horizontal taps have no band entry == zero padding for free.
    """
    KH, KW, Cin, Cout = w_hwio.shape
    mats = []
    for dy in range(KH):
        b = jnp.zeros((W, Cin, W, Cout), jnp.float32)
        for dx in range(KW):
            # x_in = x_out + dx - 1  <=>  eye offset k = 1 - dx (auto-truncated)
            shift = jnp.eye(W, W, k=1 - dx, dtype=jnp.float32)
            b = b + jnp.einsum("io,cd->icod", shift, w_hwio[dy, dx])
        mats.append(b.reshape(W * Cin, W * Cout))
    return jnp.stack(mats, axis=0).astype(compute_dtype)


# -----------------------------------------------------------------------------
# Public wrappers
# -----------------------------------------------------------------------------
def conv_block_nhwc(x_nhwc, w_hwio, conv_bias, gamma, beta, running_mean,
                    running_var, *, act="relu", eps=1e-5,
                    compute_dtype=jnp.bfloat16):
    """ConvBlock.forward in NHWC (preferred: no boundary transposes)."""
    N, H, W, Cin = x_nhwc.shape
    KH, KW, _, Cout = w_hwio.shape
    assert (KH, KW) == (3, 3), "only kernel_size=3, stride=1, padding=1"

    # Inference-mode BN folding: scale into the conv weights, shift into bias.
    scale = gamma / jnp.sqrt(running_var + eps)                    # (Cout,)
    bias = (conv_bias - running_mean) * scale + beta               # (Cout,)
    banded = _banded_weights(w_hwio * scale.reshape(1, 1, 1, Cout), W,
                             compute_dtype)                        # (3, W*Cin, W*Cout)
    bias_tiled = jnp.tile(bias.reshape(1, Cout), (1, W)).astype(jnp.float32)

    x2d = x_nhwc.reshape(N, H, W * Cin)      # free metadata reshape (row-major)

    kernel = functools.partial(_conv_bn_act_kernel, act=act,
                               compute_dtype=compute_dtype)
    out = pl.pallas_call(
        kernel,
        out_shape=jax.ShapeDtypeStruct((N, H, W * Cout), x_nhwc.dtype),
        grid=(N,),
        in_specs=[
            pl.BlockSpec((1, H, W * Cin), lambda n: (n, 0, 0)),
            pl.BlockSpec((KH, W * Cin, W * Cout), lambda n: (0, 0, 0)),
            pl.BlockSpec((1, W * Cout), lambda n: (0, 0)),
        ],
        out_specs=pl.BlockSpec((1, H, W * Cout), lambda n: (n, 0, 0)),
        scratch_shapes=[pltpu.VMEM((H + 2, W * Cin), jnp.float32)],
        compiler_params=pltpu.CompilerParams(
            dimension_semantics=("parallel",)),
    )(x2d, banded, bias_tiled)
    return out.reshape(N, H, W, Cout)


def conv_block_nchw(x_nchw, params, *, act="relu", eps=1e-5,
                    compute_dtype=jnp.bfloat16):
    """PyTorch-interface ConvBlock.forward: NCHW in, NCHW out.

    Prefer conv_block_nhwc end-to-end to avoid the boundary transposes; they
    are kept here only to match the PyTorch module's layout contract.
    """
    w_hwio = jnp.transpose(params["weight"], (2, 3, 1, 0))   # OIHW -> HWIO
    x_nhwc = jnp.transpose(x_nchw, (0, 2, 3, 1))
    y = conv_block_nhwc(x_nhwc, w_hwio, params["bias"], params["gamma"],
                        params["beta"], params["running_mean"],
                        params["running_var"], act=act, eps=eps,
                        compute_dtype=compute_dtype)
    return jnp.transpose(y, (0, 3, 1, 2))


# -----------------------------------------------------------------------------
# Pure-JAX reference (matches the kernel's bf16 operand rounding)
# -----------------------------------------------------------------------------
def ref_conv_block_nchw(x_nchw, params, *, act="relu", eps=1e-5,
                        compute_dtype=jnp.bfloat16):
    scale = params["gamma"] / jnp.sqrt(params["running_var"] + eps)
    bias = (params["bias"] - params["running_mean"]) * scale + params["beta"]
    w_hwio = jnp.transpose(params["weight"], (2, 3, 1, 0))
    w_eff = (w_hwio * scale.reshape(1, 1, 1, -1)).astype(compute_dtype)
    w_eff = w_eff.astype(jnp.float32)
    x_nhwc = jnp.transpose(x_nchw, (0, 2, 3, 1)).astype(compute_dtype)
    x_nhwc = x_nhwc.astype(jnp.float32)
    y = jax.lax.conv_general_dilated(
        x_nhwc, w_eff, window_strides=(1, 1), padding=((1, 1), (1, 1)),
        dimension_numbers=("NHWC", "HWIO", "NHWC"))
    y = y + bias.reshape(1, 1, 1, -1)
    if act == "relu":
        y = jnp.maximum(y, 0.0)
    elif act == "lrelu":
        y = jnp.where(y > 0.0, y, 0.01 * y)
    elif act == "sigmoid":
        y = jax.nn.sigmoid(y)
    return jnp.transpose(y, (0, 3, 1, 2))


# -----------------------------------------------------------------------------
if __name__ == "__main__":
    # ConvBlock(in_channels=4, out_channels=8, act='relu')
    N, Cin, Cout, H, W = 2, 4, 8, 16, 16

    key = jax.random.PRNGKey(0)
    kx, kw, kb = jax.random.split(key, 3)
    x = jax.random.normal(kx, (N, Cin, H, W), jnp.float32)   # NCHW like PyTorch

    fan_in = Cin * 9
    bound = 1.0 / (fan_in ** 0.5)
    params = {
        # PyTorch Conv2d layout (Cout, Cin, kH, kW) + bias
        "weight": jax.random.uniform(kw, (Cout, Cin, 3, 3), jnp.float32,
                                     -bound, bound),
        "bias": jax.random.uniform(kb, (Cout,), jnp.float32, -bound, bound),
        # Fresh BatchNorm2d buffers (inference mode)
        "gamma": jnp.ones((Cout,), jnp.float32),
        "beta": jnp.zeros((Cout,), jnp.float32),
        "running_mean": jnp.zeros((Cout,), jnp.float32),
        "running_var": jnp.ones((Cout,), jnp.float32),
    }

    # act='relu' (the canonical configuration)
    fwd = jax.jit(functools.partial(conv_block_nchw, act="relu"))
    out = fwd(x, params)
    jax.block_until_ready(out)
    assert out.shape == (N, Cout, H, W)

    ref = ref_conv_block_nchw(x, params, act="relu")
    max_err = float(jnp.max(jnp.abs(out - ref)))
    assert jnp.allclose(out, ref, atol=1e-3, rtol=1e-3), max_err

    # act=None path (dummy_act) exercises the activation plumbing.
    out_id = jax.jit(functools.partial(conv_block_nchw, act=None))(x, params)
    jax.block_until_ready(out_id)
    ref_id = ref_conv_block_nchw(x, params, act=None)
    assert jnp.allclose(out_id, ref_id, atol=1e-3, rtol=1e-3)

    print("KERNEL_OK")
</pallas_src>

<mosaic_0001>
module attributes {stable_mosaic.version = 11 : i64} {
  func.func @_conv_bn_act_kernel(%arg0: i32, %arg1: memref<1x16x64xf32, #tpu.memory_space<vmem>>, %arg2: memref<3x64x128xbf16, #tpu.memory_space<vmem>>, %arg3: memref<1x128xf32, #tpu.memory_space<vmem>>, %arg4: memref<1x16x128xf32, #tpu.memory_space<vmem>>, %arg5: memref<18x64xf32, #tpu.memory_space<vmem>>) attributes {dimension_semantics = [#tpu.dimension_semantics<parallel>], iteration_bounds = array<i64: 2>, scalar_prefetch = 0 : i64, scratch_operands = 1 : i64, tpu.core_type = #tpu.core_type<tc>, window_params = [{transform_indices = @transform_0, window_bounds = array<i64: 1, 16, 64>}, {pipeline_mode = #tpu.pipeline_mode<synchronous>, transform_indices = @transform_1, window_bounds = array<i64: 3, 64, 128>}, {pipeline_mode = #tpu.pipeline_mode<synchronous>, transform_indices = @transform_2, window_bounds = array<i64: 1, 128>}, {transform_indices = @transform_3, window_bounds = array<i64: 1, 16, 128>}]} {
    %cst = arith.constant 0.000000e+00 : f32
    %0 = vector.broadcast %cst : f32 to vector<1x64xf32>
    %c0 = arith.constant 0 : index
    %c0_0 = arith.constant 0 : index
    %1 = vector.load %arg5[%c0, %c0_0] : memref<18x64xf32, #tpu.memory_space<vmem>>, vector<1x64xf32>
    tpu.vector_store %arg5[%c0, %c0_0], %0 {strides = array<i32>} : memref<18x64xf32, #tpu.memory_space<vmem>>, vector<1x64xf32>,
    %c17 = arith.constant 17 : index
    %c0_1 = arith.constant 0 : index
    %2 = vector.load %arg5[%c17, %c0_1] : memref<18x64xf32, #tpu.memory_space<vmem>>, vector<1x64xf32>
    tpu.vector_store %arg5[%c17, %c0_1], %0 {strides = array<i32>} : memref<18x64xf32, #tpu.memory_space<vmem>>, vector<1x64xf32>,
    %c0_2 = arith.constant 0 : index
    %c0_3 = arith.constant 0 : index
    %c0_4 = arith.constant 0 : index
    %3 = vector.load %arg1[%c0_2, %c0_3, %c0_4] : memref<1x16x64xf32, #tpu.memory_space<vmem>>, vector<1x16x64xf32>
    %4 = vector.shape_cast %3 : vector<1x16x64xf32> to vector<16x64xf32>
    %c1 = arith.constant 1 : index
    %c0_5 = arith.constant 0 : index
    %5 = vector.load %arg5[%c1, %c0_5] : memref<18x64xf32, #tpu.memory_space<vmem>>, vector<16x64xf32>
    tpu.vector_store %arg5[%c1, %c0_5], %4 {strides = array<i32>} : memref<18x64xf32, #tpu.memory_space<vmem>>, vector<16x64xf32>,
    %cst_6 = arith.constant 0.000000e+00 : f32
    %6 = vector.broadcast %cst_6 : f32 to vector<16x128xf32>
    %c0_7 = arith.constant 0 : index
    %c0_8 = arith.constant 0 : index
    %7 = vector.load %arg5[%c0_7, %c0_8] : memref<18x64xf32, #tpu.memory_space<vmem>>, vector<16x64xf32>
    %8 = arith.truncf %7 : vector<16x64xf32> to vector<16x64xbf16>
    %c0_9 = arith.constant 0 : index
    %c0_10 = arith.constant 0 : index
    %c0_11 = arith.constant 0 : index
    %9 = vector.load %arg2[%c0_9, %c0_10, %c0_11] : memref<3x64x128xbf16, #tpu.memory_space<vmem>>, vector<1x64x128xbf16>
    %10 = vector.shape_cast %9 : vector<1x64x128xbf16> to vector<64x128xbf16>
    %cst_12 = arith.constant dense<0.000000e+00> : vector<16x128xf32>
    %11 = tpu.matmul %8, %10, %cst_12 {dimension_numbers = #tpu.dot_dimension_numbers<[1], [0], [0], [1], [0, 0, 1, 1], [], []>} : vector<16x64xbf16>, vector<64x128xbf16>, vector<16x128xf32> -> vector<16x128xf32>
    %12 = arith.addf %6, %11 : vector<16x128xf32>
    %c1_13 = arith.constant 1 : index
    %c0_14 = arith.constant 0 : index
    %13 = vector.load %arg5[%c1_13, %c0_14] : memref<18x64xf32, #tpu.memory_space<vmem>>, vector<16x64xf32>
    %14 = arith.truncf %13 : vector<16x64xf32> to vector<16x64xbf16>
    %c1_15 = arith.constant 1 : index
    %c0_16 = arith.constant 0 : index
    %c0_17 = arith.constant 0 : index
    %15 = vector.load %arg2[%c1_15, %c0_16, %c0_17] : memref<3x64x128xbf16, #tpu.memory_space<vmem>>, vector<1x64x128xbf16>
    %16 = vector.shape_cast %15 : vector<1x64x128xbf16> to vector<64x128xbf16>
    %cst_18 = arith.constant dense<0.000000e+00> : vector<16x128xf32>
    %17 = tpu.matmul %14, %16, %cst_18 {dimension_numbers = #tpu.dot_dimension_numbers<[1], [0], [0], [1], [0, 0, 1, 1], [], []>} : vector<16x64xbf16>, vector<64x128xbf16>, vector<16x128xf32> -> vector<16x128xf32>
    %18 = arith.addf %12, %17 : vector<16x128xf32>
    %c2 = arith.constant 2 : index
    %c0_19 = arith.constant 0 : index
    %19 = vector.load %arg5[%c2, %c0_19] : memref<18x64xf32, #tpu.memory_space<vmem>>, vector<16x64xf32>
    %20 = arith.truncf %19 : vector<16x64xf32> to vector<16x64xbf16>
    %c2_20 = arith.constant 2 : index
    %c0_21 = arith.constant 0 : index
    %c0_22 = arith.constant 0 : index
    %21 = vector.load %arg2[%c2_20, %c0_21, %c0_22] : memref<3x64x128xbf16, #tpu.memory_space<vmem>>, vector<1x64x128xbf16>
    %22 = vector.shape_cast %21 : vector<1x64x128xbf16> to vector<64x128xbf16>
    %cst_23 = arith.constant dense<0.000000e+00> : vector<16x128xf32>
    %23 = tpu.matmul %20, %22, %cst_23 {dimension_numbers = #tpu.dot_dimension_numbers<[1], [0], [0], [1], [0, 0, 1, 1], [], []>} : vector<16x64xbf16>, vector<64x128xbf16>, vector<16x128xf32> -> vector<16x128xf32>
    %24 = arith.addf %18, %23 : vector<16x128xf32>
    %c0_24 = arith.constant 0 : index
    %c0_25 = arith.constant 0 : index
    %25 = vector.load %arg3[%c0_24, %c0_25] : memref<1x128xf32, #tpu.memory_space<vmem>>, vector<1x128xf32>
    %26 = vector.broadcast %25 : vector<1x128xf32> to vector<16x128xf32>
    %27 = arith.addf %24, %26 : vector<16x128xf32>
    %cst_26 = arith.constant 0.000000e+00 : f32
    %28 = vector.broadcast %cst_26 : f32 to vector<16x128xf32>
    %29 = arith.maximumf %27, %28 : vector<16x128xf32>
    %c0_27 = arith.constant 0 : index
    %c0_28 = arith.constant 0 : index
    %c0_29 = arith.constant 0 : index
    %30 = vector.load %arg4[%c0_27, %c0_28, %c0_29] : memref<1x16x128xf32, #tpu.memory_space<vmem>>, vector<1x16x128xf32>
    %31 = vector.shape_cast %30 : vector<1x16x128xf32> to vector<16x128xf32>
    %32 = vector.shape_cast %29 : vector<16x128xf32> to vector<1x16x128xf32>
    tpu.vector_store %arg4[%c0_27, %c0_28, %c0_29], %32 {strides = array<i32>} : memref<1x16x128xf32, #tpu.memory_space<vmem>>, vector<1x16x128xf32>,
    return
  }
  func.func @transform_0(%arg0: i32) -> (i32, i32, i32) {
    %c0_i32 = arith.constant 0 : i32
    %c0_i32_0 = arith.constant 0 : i32
    %c0_i32_1 = arith.constant 0 : i32
    return %arg0, %c0_i32, %c0_i32_0 : i32, i32, i32
  }
  func.func @transform_1(%arg0: i32) -> (i32, i32, i32) {
    %c0_i32 = arith.constant 0 : i32
    %c0_i32_0 = arith.constant 0 : i32
    %c0_i32_1 = arith.constant 0 : i32
    %c0_i32_2 = arith.constant 0 : i32
    return %c0_i32, %c0_i32_0, %c0_i32_1 : i32, i32, i32
  }
  func.func @transform_2(%arg0: i32) -> (i32, i32) {
    %c0_i32 = arith.constant 0 : i32
    %c0_i32_0 = arith.constant 0 : i32
    %c0_i32_1 = arith.constant 0 : i32
    return %c0_i32, %c0_i32_0 : i32, i32
  }
  func.func @transform_3(%arg0: i32) -> (i32, i32, i32) {
    %c0_i32 = arith.constant 0 : i32
    %c0_i32_0 = arith.constant 0 : i32
    %c0_i32_1 = arith.constant 0 : i32
    return %arg0, %c0_i32, %c0_i32_0 : i32, i32, i32
  }
}

</mosaic_0001>

<llo_original>
// kernel: conv_block_nchw.1
$region0: #{conv_block_nchw.1}
  #allocation0 [shape = 'u32[]', space=smem, size = 0x4, offset = 0x4, fixed_abs, tag = 'smem constant byte address 0x4 - core index']
  #allocation1 [shape = 'u32[144,128]{1,0:T(1,128)}', space=vmem, size = 0x12000, scoped, tag = 'internal scratch']
  #allocation2 [shape = 'f32[18,64]{1,0:T(8,128)}', space=vmem, size = 0x3000, scoped, tag = 'scratch operand']
  %s0 = inlined_call_operand.vmem [shape: f32[2,16,64], index: 0, kind: input, shape index: {}]
  %s1 = inlined_call_operand.vmem [shape: bf16[3,64,128], index: 1, kind: input, shape index: {}]
  %s2 = inlined_call_operand.vmem [shape: f32[1,128], index: 2, kind: input, shape index: {}]
  %s3 = inlined_call_operand.vmem [shape: f32[2,16,128], index: 3, kind: output, shape index: {}]
  %s4 = sld [smem:[#allocation0]]
  $region45: #{conv_block_nchw.1} parent=0
    _
  %s6 = ssub.s32 1, %s4
  %s7 = scalar_select 0, %s6, %s4
  loop: start=0, step=1, limit=4
  $region2: #{conv_block_nchw.1} parent=0 // loop_pre_header
    _
  $region3: #{conv_block_nchw.1} parent=0 // loop_header
    %s9 = sphi 0, %s13
    %p10 = scmp.ge.s32.totalorder %s9, 4
    %s19 = sphi 0, %s21
    %s22 = sphi 0, %s19
    %s23 = sphi 0, %s22
    %s39 = sphi 0, %s23
    %s43 = sphi 0, %s43
    %s45 = sphi 0, %s43
    %s46 = sphi 0, %s45
    %s60 = sphi 0, %s46
    %s64 = sphi 0, %s64
    %s66 = sphi 0, %s64
    %s67 = sphi 0, %s66
    %s81 = sphi 0, %s67
    %s87 = sphi 0, %s89
    %s90 = sphi 0, %s87
    %s91 = sphi 0, %s90
    %s107 = sphi 0, %s91
  $region4: #{conv_block_nchw.1} parent=0 // loop_header_branch
    %12 = sbr.rel (%p10) target = $region8
  $region5: #{conv_block_nchw.1} parent=0 // loop_body
    %s14 = ssub.s32 %s9, 1
    %s15 = ssub.s32 %s9, 2
    %s16 = sadd.s32 %s9, 1
    %s17 = ssub.s32 %s9, %s16
    %p18 = scmp.eq.s32.totalorder %s17, 0
    %s20 = sadd.s32 %s19, 1
    %s21 = scalar_select %p18, %s19, %s20
    %p24 = pneg %p18
    %p25 = scmp.eq.s32.totalorder %s9, 1
    %p26 = por %p24, %p25
    %p27 = scmp.ne.s32.totalorder %s19, %s22
    %p28 = scmp.eq.s32.totalorder %s9, 0
    %p29 = por %p27, %p28
    %p30 = scmp.ne.s32.totalorder %s19, %s22
    %p31 = scmp.eq.s32.totalorder %s14, 1
    %p32 = por %p30, %p31
    %p33 = scmp.ne.s32.totalorder %s22, %s23
    %p34 = scmp.eq.s32.totalorder %s14, 0
    %p35 = por %p33, %p34
    %p36 = scmp.ne.s32.totalorder %s22, %s23
    %p37 = scmp.eq.s32.totalorder %s15, 1
    %p38 = por %p36, %p37
    %p40 = scmp.ne.s32.totalorder %s23, %s39
    %p41 = scmp.eq.s32.totalorder %s15, 0
    %p42 = por %p40, %p41
    %s44 = sadd.s32 %s43, 1
    %p47 = scmp.eq.s32.totalorder %s9, 1
    %p48 = scmp.ne.s32.totalorder %s43, %s45
    %p49 = scmp.eq.s32.totalorder %s9, 0
    %p50 = por %p48, %p49
    %p51 = scmp.ne.s32.totalorder %s43, %s45
    %p52 = scmp.eq.s32.totalorder %s14, 1
    %p53 = por %p51, %p52
    %p54 = scmp.ne.s32.totalorder %s45, %s46
    %p55 = scmp.eq.s32.totalorder %s14, 0
    %p56 = por %p54, %p55
    %p57 = scmp.ne.s32.totalorder %s45, %s46
    %p58 = scmp.eq.s32.totalorder %s15, 1
    %p59 = por %p57, %p58
    %p61 = scmp.ne.s32.totalorder %s46, %s60
    %p62 = scmp.eq.s32.totalorder %s15, 0
    %p63 = por %p61, %p62
    %s65 = sadd.s32 %s64, 1
    %p68 = scmp.eq.s32.totalorder %s9, 1
    %p69 = scmp.ne.s32.totalorder %s64, %s66
    %p70 = scmp.eq.s32.totalorder %s9, 0
    %p71 = por %p69, %p70
    %p72 = scmp.ne.s32.totalorder %s64, %s66
    %p73 = scmp.eq.s32.totalorder %s14, 1
    %p74 = por %p72, %p73
    %p75 = scmp.ne.s32.totalorder %s66, %s67
    %p76 = scmp.eq.s32.totalorder %s14, 0
    %p77 = por %p75, %p76
    %p78 = scmp.ne.s32.totalorder %s66, %s67
    %p79 = scmp.eq.s32.totalorder %s15, 1
    %p80 = por %p78, %p79
    %p82 = scmp.ne.s32.totalorder %s67, %s81
    %p83 = scmp.eq.s32.totalorder %s15, 0
    %p84 = por %p82, %p83
    %s85 = ssub.s32 %s9, %s16
    %p86 = scmp.eq.s32.totalorder %s85, 0
    %s88 = sadd.s32 %s87, 1
    %s89 = scalar_select %p86, %s87, %s88
    %p92 = pneg %p86
    %p93 = scmp.eq.s32.totalorder %s9, 1
    %p94 = por %p92, %p93
    %p95 = scmp.ne.s32.totalorder %s87, %s90
    %p96 = scmp.eq.s32.totalorder %s9, 0
    %p97 = por %p95, %p96
    %p98 = scmp.ne.s32.totalorder %s87, %s90
    %p99 = scmp.eq.s32.totalorder %s14, 1
    %p100 = por %p98, %p99
    %p101 = scmp.ne.s32.totalorder %s90, %s91
    %p102 = scmp.eq.s32.totalorder %s14, 0
    %p103 = por %p101, %p102
    %p104 = scmp.ne.s32.totalorder %s90, %s91
    %p105 = scmp.eq.s32.totalorder %s15, 1
    %p106 = por %p104, %p105
    %p108 = scmp.ne.s32.totalorder %s91, %s107
    %p109 = scmp.eq.s32.totalorder %s15, 0
    %p110 = por %p108, %p109
    %p111 = scmp.le.s32.totalorder 1, %s9
    %p112 = scmp.lt.s32.totalorder %s9, 3
    %p113 = pnand %p111, %p112
    %p114 = pneg %p113
    // Predicated region
    $region9: #{conv_block_nchw.1} parent=5 // pred_check
      _
    $region10: #{conv_block_nchw.1} parent=5 // pred_check_branch
      %116 = sbr.rel (%p113) target = $region12
    $region11: #{conv_block_nchw.1} parent=5 // pred_region
      %s117 = ssub.s32 %s9, 1
      // Predicated region
      $region13: #{conv_block_nchw.1} parent=11 // pred_check
        %p118 = pneg %p56
      $region14: #{conv_block_nchw.1} parent=11 // pred_check_branch
        %120 = sbr.rel (%p118) target = $region16
      $region15: #{conv_block_nchw.1} parent=11 // pred_region
        _
      $region16: #{conv_block_nchw.1} parent=11 // pred_fallthru
        _
      // Predicated region
      $region17: #{conv_block_nchw.1} parent=11 // pred_check
        %p121 = pneg %p77
      $region18: #{conv_block_nchw.1} parent=11 // pred_check_branch
        %123 = sbr.rel (%p121) target = $region20
      $region19: #{conv_block_nchw.1} parent=11 // pred_region
        _
      $region20: #{conv_block_nchw.1} parent=11 // pred_fallthru
        _
    $region12: #{conv_block_nchw.1} parent=5 // pred_fallthru
      _
    %p124 = scmp.lt.s32.totalorder %s9, 2
    // Predicated region
    $region21: #{conv_block_nchw.1} parent=5 // pred_check
      %p125 = pneg %p124
    $region22: #{conv_block_nchw.1} parent=5 // pred_check_branch
      %127 = sbr.rel (%p125) target = $region24
    $region23: #{conv_block_nchw.1} parent=5 // pred_region
      // Predicated region
      $region25: #{conv_block_nchw.1} parent=23 // pred_check
        %p128 = pneg %p29
      $region26: #{conv_block_nchw.1} parent=23 // pred_check_branch
        %130 = sbr.rel (%p128) target = $region28
      $region27: #{conv_block_nchw.1} parent=23 // pred_region
        %p131 = scmp.lt.s32.totalorder %s9, 1
        %s132 = scalar_select %p131, %s9, 1
        %s133 = smul.addr %s132, 2
        %s134 = smul.addr %s133, 8
        %s135 = scalar_lea.vmem %s0, %s134
      $region28: #{conv_block_nchw.1} parent=23 // pred_fallthru
        _
    $region24: #{conv_block_nchw.1} parent=5 // pred_fallthru
      _
    %p136 = scmp.le.s32.totalorder 1, %s9
    %p137 = scmp.lt.s32.totalorder %s9, 3
    %p138 = pnand %p136, %p137
    %p139 = pneg %p138
    // Predicated region
    $region29: #{conv_block_nchw.1} parent=5 // pred_check
      _
    $region30: #{conv_block_nchw.1} parent=5 // pred_check_branch
      %141 = sbr.rel (%p138) target = $region32
    $region31: #{conv_block_nchw.1} parent=5 // pred_region
      %s142 = ssub.s32 %s9, 1
      %p143 = scmp.lt.s32.totalorder %s14, 1
      %s144 = scalar_select %p143, %s14, 1
      %s145 = smul.addr %s144, 2
      %s146 = smul.addr %s145, 8
      %s147 = scalar_lea.vmem %s0, %s146
      %p148 = pneg %p35
      %p149 = pneg %p32
      %p150 = pneg %p56
      %p151 = pneg %p53
      %p152 = pneg %p77
      %p153 = pneg %p74
      %p154 = pneg %p103
      %p155 = pneg %p100
      %p156 = scmp.lt.s32.totalorder %s14, 1
      %s157 = scalar_select %p156, %s14, 1
      %s158 = smul.addr %s157, 2
      %s159 = smul.addr %s158, 8
      %s160 = scalar_lea.vmem %s3, %s159
      %p161 = scmp.lt.s32.totalorder %s14, 1
      %s162 = scalar_select %p161, %s14, 1
      %s163 = smul.addr %s162, 2
      %s164 = smul.addr %s163, 8
      %s165 = scalar_lea.vmem %s0, %s164
      %p166 = scmp.lt.s32.totalorder %s14, 1
      %s167 = scalar_select %p166, %s14, 1
      %s168 = smul.addr %s167, 2
      %s169 = smul.addr %s168, 8
      %s170 = scalar_lea.vmem %s3, %s169
      %vm172 = vcmask 516096
      %173 = vst.msk [vmem:[#allocation2] sm:$0x1] %vm172, 0.0
      %174 = vst.msk [vmem:[#allocation2 + $0x11] sm:$0x1] %vm172, 0.0
      %v175 = vld [vmem:[%s165] sm:$0xff]
      %v176 = vld [vmem:[%s165 + $0x8] sm:$0xff]
      %vm177 = vcmask 523264
      %178 = vst.msk [vmem:[#allocation2 + $0x1] sm:$0xff] %vm177, %v175
      %179 = vst.msk [vmem:[#allocation2 + $0x9] sm:$0xff] %vm177, %v176
      %v180 = vld [vmem:[#allocation2] sm:$0xff]
      %v181 = vld [vmem:[#allocation2 + $0x8] sm:$0xff]
      %v182 = vpack.c.bf16 %v181, %v180
      %v183 = vld [vmem:[%s1] sm:$0xf]
      %v184 = vld [vmem:[%s1 + $0x4] sm:$0xf]
      %v185 = vld [vmem:[%s1 + $0x8] sm:$0xf]
      %v186 = vld [vmem:[%s1 + $0xc] sm:$0xf]
      %v187 = vld [vmem:[%s1 + $0x10] sm:$0xf]
      %v188 = vld [vmem:[%s1 + $0x14] sm:$0xf]
      %v189 = vld [vmem:[%s1 + $0x18] sm:$0xf]
      %v190 = vld [vmem:[%s1 + $0x1c] sm:$0xf]
      %v191 = vld [vmem:[#allocation2 + $0x1] sm:$0xff]
      %v192 = vld [vmem:[#allocation2 + $0x9] sm:$0xff]
      %v193 = vpack.c.bf16 %v192, %v191
      %s194 = scalar_lea.vmem %s1, 32
      %v195 = vld [vmem:[%s194] sm:$0xf]
      %v196 = vld [vmem:[%s194 + $0x4] sm:$0xf]
      %v197 = vld [vmem:[%s194 + $0x8] sm:$0xf]
      %v198 = vld [vmem:[%s194 + $0xc] sm:$0xf]
      %v199 = vld [vmem:[%s194 + $0x10] sm:$0xf]
      %v200 = vld [vmem:[%s194 + $0x14] sm:$0xf]
      %v201 = vld [vmem:[%s194 + $0x18] sm:$0xf]
      %v202 = vld [vmem:[%s194 + $0x1c] sm:$0xf]
      %v211 = vunpack.c.l.b16 %v195
      %v212 = vunpack.c.l.b16 %v196
      %v213 = vunpack.c.l.b16 %v197
      %v214 = vunpack.c.l.b16 %v198
      %v215 = vunpack.c.l.b16 %v199
      %v216 = vunpack.c.l.b16 %v200
      %v217 = vunpack.c.l.b16 %v201
      %v218 = vunpack.c.l.b16 %v202
      %v219 = vpack.c.b16 %v212, %v211
      %v220 = vpack.c.b16 %v214, %v213
      %v221 = vpack.c.b16 %v216, %v215
      %v222 = vpack.c.b16 %v218, %v217
      %v228 = vsel %vm177, %v193, 0
      %230 = vmatprep.subr.bf16.mxu0 0
      %231 = vmatpush1.bf16.msra.mxu0 0
      %232 = vmatprep.subr.bf16.mxu0 0
      %233 = vmatpush1.bf16.msra.mxu0 0
      %234 = vmatprep.subr.bf16.mxu0 0
      %235 = vmatpush1.bf16.msra.mxu0 0
      %236 = vmatprep.subr.bf16.mxu0 0
      %237 = vmatpush1.bf16.msra.mxu0 0
      %238 = vmatprep.subr.bf16.mxu0 0
      %239 = vmatpush1.bf16.msra.mxu0 %v222
      %240 = vmatprep.subr.bf16.mxu0 0
      %241 = vmatpush1.bf16.msra.mxu0 %v221
      %242 = vmatprep.subr.bf16.mxu0 0
      %243 = vmatpush1.bf16.msra.mxu0 %v220
      %244 = vmatprep.subr.bf16.mxu0 0
      %245 = vmatpush1.bf16.msra.mxu0 %v219
      %246 = vmatprep.subr.bf16.mxu0 0
      %247 = vmatpush2.bf16.msra.mxu0 0
      %248 = vmatprep.subr.bf16.mxu0 0
      %249 = vmatpush2.bf16.msra.mxu0 0
      %250 = vmatprep.subr.bf16.mxu0 0
      %251 = vmatpush2.bf16.msra.mxu0 0
      %252 = vmatprep.subr.bf16.mxu0 0
      %253 = vmatpush2.bf16.msra.mxu0 0
      %254 = vmatprep.subr.bf16.mxu0 0
      %255 = vmatpush2.bf16.msra.mxu0 0
      %256 = vmatprep.subr.bf16.mxu0 0
      %257 = vmatpush2.bf16.msra.mxu0 0
      %258 = vmatprep.subr.bf16.mxu0 0
      %259 = vmatpush2.bf16.msra.mxu0 0
      %260 = vmatprep.subr.bf16.mxu0 0
      %261 = vmatpush2.bf16.msra.mxu0 0
      %262 = vmatprep.mubr.bf16.mxu0 0
      %263 = vmatmul.mubr.bf16.gmra.mxu0 %v228
      %v264 = vpop.f32.mrf.mxu0
      %v265 = vadd.f32 0.0, %v264
      %v266 = vpop.f32.mrf.mxu0
      %v267 = vpop.f32.mrf.mxu0
      %v268 = vadd.f32 0.0, %v267
      %v269 = vpop.f32.mrf.mxu0
      %270 = vdwg.mxu0
      %v279 = vunpack.c.l.b16 %v183
      %v280 = vunpack.c.l.b16 %v184
      %v281 = vunpack.c.l.b16 %v185
      %v282 = vunpack.c.l.b16 %v186
      %v283 = vunpack.c.l.b16 %v187
      %v284 = vunpack.c.l.b16 %v188
      %v285 = vunpack.c.l.b16 %v189
      %v286 = vunpack.c.l.b16 %v190
      %v287 = vpack.c.b16 %v280, %v279
      %v288 = vpack.c.b16 %v282, %v281
      %v289 = vpack.c.b16 %v284, %v283
      %v290 = vpack.c.b16 %v286, %v285
      %v296 = vsel %vm177, %v182, 0
      %298 = vmatprep.subr.bf16.mxu0 0
      %299 = vmatpush1.bf16.msra.mxu0 0
      %300 = vmatprep.subr.bf16.mxu0 0
      %301 = vmatpush1.bf16.msra.mxu0 0
      %302 = vmatprep.subr.bf16.mxu0 0
      %303 = vmatpush1.bf16.msra.mxu0 0
      %304 = vmatprep.subr.bf16.mxu0 0
      %305 = vmatpush1.bf16.msra.mxu0 0
      %306 = vmatprep.subr.bf16.mxu0 0
      %307 = vmatpush1.bf16.msra.mxu0 %v290
      %308 = vmatprep.subr.bf16.mxu0 0
      %309 = vmatpush1.bf16.msra.mxu0 %v289
      %310 = vmatprep.subr.bf16.mxu0 0
      %311 = vmatpush1.bf16.msra.mxu0 %v288
      %312 = vmatprep.subr.bf16.mxu0 0
      %313 = vmatpush1.bf16.msra.mxu0 %v287
      %314 = vmatprep.subr.bf16.mxu0 0
      %315 = vmatpush2.bf16.msra.mxu0 0
      %316 = vmatprep.subr.bf16.mxu0 0
      %317 = vmatpush2.bf16.msra.mxu0 0
      %318 = vmatprep.subr.bf16.mxu0 0
      %319 = vmatpush2.bf16.msra.mxu0 0
      %320 = vmatprep.subr.bf16.mxu0 0
      %321 = vmatpush2.bf16.msra.mxu0 0
      %322 = vmatprep.subr.bf16.mxu0 0
      %323 = vmatpush2.bf16.msra.mxu0 0
      %324 = vmatprep.subr.bf16.mxu0 0
      %325 = vmatpush2.bf16.msra.mxu0 0
      %326 = vmatprep.subr.bf16.mxu0 0
      %327 = vmatpush2.bf16.msra.mxu0 0
      %328 = vmatprep.subr.bf16.mxu0 0
      %329 = vmatpush2.bf16.msra.mxu0 0
      %330 = vmatprep.mubr.bf16.mxu0 0
      %331 = vmatmul.mubr.bf16.gmra.mxu0 %v296
      %v332 = vpop.f32.mrf.mxu0
      %v333 = vadd.f32 %v265, %v332
      %v334 = vpop.f32.mrf.mxu0
      %v335 = vpop.f32.mrf.mxu0
      %v336 = vadd.f32 %v268, %v335
      %v337 = vpop.f32.mrf.mxu0
      %338 = vdwg.mxu0
      %v339 = vld [vmem:[#allocation2 + $0x2] sm:$0xff]
      %v340 = vld [vmem:[#allocation2 + $0xa] sm:$0xff]
      %v341 = vpack.c.bf16 %v340, %v339
      %s342 = scalar_lea.vmem %s1, 64
      %v343 = vld [vmem:[%s342] sm:$0xf]
      %v344 = vld [vmem:[%s342 + $0x4] sm:$0xf]
      %v345 = vld [vmem:[%s342 + $0x8] sm:$0xf]
      %v346 = vld [vmem:[%s342 + $0xc] sm:$0xf]
      %v347 = vld [vmem:[%s342 + $0x10] sm:$0xf]
      %v348 = vld [vmem:[%s342 + $0x14] sm:$0xf]
      %v349 = vld [vmem:[%s342 + $0x18] sm:$0xf]
      %v350 = vld [vmem:[%s342 + $0x1c] sm:$0xf]
      %v359 = vunpack.c.l.b16 %v343
      %v360 = vunpack.c.l.b16 %v344
      %v361 = vunpack.c.l.b16 %v345
      %v362 = vunpack.c.l.b16 %v346
      %v363 = vunpack.c.l.b16 %v347
      %v364 = vunpack.c.l.b16 %v348
      %v365 = vunpack.c.l.b16 %v349
      %v366 = vunpack.c.l.b16 %v350
      %v367 = vpack.c.b16 %v360, %v359
      %v368 = vpack.c.b16 %v362, %v361
      %v369 = vpack.c.b16 %v364, %v363
      %v370 = vpack.c.b16 %v366, %v365
      %v376 = vsel %vm177, %v341, 0
      %378 = vmatprep.subr.bf16.mxu0 0
      %379 = vmatpush1.bf16.msra.mxu0 0
      %380 = vmatprep.subr.bf16.mxu0 0
      %381 = vmatpush1.bf16.msra.mxu0 0
      %382 = vmatprep.subr.bf16.mxu0 0
      %383 = vmatpush1.bf16.msra.mxu0 0
      %384 = vmatprep.subr.bf16.mxu0 0
      %385 = vmatpush1.bf16.msra.mxu0 0
      %386 = vmatprep.subr.bf16.mxu0 0
      %387 = vmatpush1.bf16.msra.mxu0 %v370
      %388 = vmatprep.subr.bf16.mxu0 0
      %389 = vmatpush1.bf16.msra.mxu0 %v369
      %390 = vmatprep.subr.bf16.mxu0 0
      %391 = vmatpush1.bf16.msra.mxu0 %v368
      %392 = vmatprep.subr.bf16.mxu0 0
      %393 = vmatpush1.bf16.msra.mxu0 %v367
      %394 = vmatprep.subr.bf16.mxu0 0
      %395 = vmatpush2.bf16.msra.mxu0 0
      %396 = vmatprep.subr.bf16.mxu0 0
      %397 = vmatpush2.bf16.msra.mxu0 0
      %398 = vmatprep.subr.bf16.mxu0 0
      %399 = vmatpush2.bf16.msra.mxu0 0
      %400 = vmatprep.subr.bf16.mxu0 0
      %401 = vmatpush2.bf16.msra.mxu0 0
      %402 = vmatprep.subr.bf16.mxu0 0
      %403 = vmatpush2.bf16.msra.mxu0 0
      %404 = vmatprep.subr.bf16.mxu0 0
      %405 = vmatpush2.bf16.msra.mxu0 0
      %406 = vmatprep.subr.bf16.mxu0 0
      %407 = vmatpush2.bf16.msra.mxu0 0
      %408 = vmatprep.subr.bf16.mxu0 0
      %409 = vmatpush2.bf16.msra.mxu0 0
      %410 = vmatprep.mubr.bf16.mxu0 0
      %411 = vmatmul.mubr.bf16.gmra.mxu0 %v376
      %v412 = vpop.f32.mrf.mxu0
      %v413 = vadd.f32 0.0, %v412
      %v414 = vpop.f32.mrf.mxu0
      %v415 = vpop.f32.mrf.mxu0
      %v416 = vadd.f32 0.0, %v415
      %v417 = vpop.f32.mrf.mxu0
      %418 = vdwg.mxu0
      %v419 = vadd.f32 %v333, %v413
      %v420 = vadd.f32 %v336, %v416
      %v421 = vld [vmem:[%s2] sm:$0x1]
      %v423 = vlaneseq
      %v424 = vshrl.u32 %v423, 7
      %v425 = vsub.s32 0, %v424
      %v426 = vrot.slane %v421, %v425
      %v428 = vadd.f32 %v419, %v426
      %v429 = vadd.f32 %v420, %v426
      %v430 = vmax.f32 %v428, 0.0
      %v431 = vmax.f32 %v429, 0.0
      %432 = vst [vmem:[%s170] sm:$0xff] %v430
      %433 = vst [vmem:[%s170 + $0x8] sm:$0xff] %v431
      %p434 = scmp.lt.s32.totalorder %s14, 1
      %s435 = scalar_select %p434, %s14, 1
      %s436 = smul.addr %s435, 2
      %s437 = smul.addr %s436, 8
      %s438 = scalar_lea.vmem %s3, %s437
      // Predicated region
      $region33: #{conv_block_nchw.1} parent=31 // pred_check
        %p439 = pneg %p100
      $region34: #{conv_block_nchw.1} parent=31 // pred_check_branch
        %441 = sbr.rel (%p439) target = $region36
      $region35: #{conv_block_nchw.1} parent=31 // pred_region
        _
      $region36: #{conv_block_nchw.1} parent=31 // pred_fallthru
        _
    $region32: #{conv_block_nchw.1} parent=5 // pred_fallthru
      _
    %p442 = scmp.le.s32.totalorder 2, %s9
    // Predicated region
    $region37: #{conv_block_nchw.1} parent=5 // pred_check
      %p443 = pneg %p442
    $region38: #{conv_block_nchw.1} parent=5 // pred_check_branch
      %445 = sbr.rel (%p443) target = $region40
    $region39: #{conv_block_nchw.1} parent=5 // pred_region
      %s446 = ssub.s32 %s9, 2
      // Predicated region
      $region41: #{conv_block_nchw.1} parent=39 // pred_check
        %p447 = pneg %p106
      $region42: #{conv_block_nchw.1} parent=39 // pred_check_branch
        %449 = sbr.rel (%p447) target = $region44
      $region43: #{conv_block_nchw.1} parent=39 // pred_region
        %p450 = scmp.lt.s32.totalorder %s15, 1
        %s451 = scalar_select %p450, %s15, 1
        %s452 = smul.addr %s451, 2
        %s453 = smul.addr %s452, 8
        %s454 = scalar_lea.vmem %s3, %s453
      $region44: #{conv_block_nchw.1} parent=39 // pred_fallthru
        _
    $region40: #{conv_block_nchw.1} parent=5 // pred_fallthru
      _
  $region6: #{conv_block_nchw.1} parent=0 // loop_footer
    %s13 = sadd.s32 1, %s9
  $region7: #{conv_block_nchw.1} parent=0 // loop_footer_branch
    %8 = sbr.rel target = $region3
  $region8: #{conv_block_nchw.1} parent=0 // loop_exit
    _

</llo_original>
